<compile_context>
chip_gen: v5e
topology: v5e:2x2
jax: 0.10.0
libtpu: 0.0.40
codegen_flags: <defaults>
</compile_context>

<pallas_src>
import functools
import math

import jax
import jax.numpy as jnp
from jax.experimental import pallas as pl
from jax.experimental.pallas import tpu as pltpu

EPS = 1e-5
SIGMA_MIN = 0.01
SIGMA_MAX = 50.0
_LOG_SIGMA_RATIO = math.log(SIGMA_MAX / SIGMA_MIN)


def _sde_forward_kernel(t_ref, inv_sigma_ref, x_ref, w1t_ref, b1t_ref,
                        twt_ref, w2t_ref, b2t_ref, o_ref):
    """One (batch, pixel-tile) grid step.

    Layout: pixels on lanes (last dim), channels/hidden on sublanes.
      t_ref, inv_sigma_ref : (B,) f32 in SMEM (scalar prefetch)
      x_ref   : (1, C, T)     w1t_ref : (Hd, C)    b1t/twt : (Hd, 1)
      w2t_ref : (C, Hd)       b2t_ref : (C, 1)     o_ref   : (1, C, T)
    """
    b = pl.program_id(0)
    t = t_ref[b]
    inv_sigma = inv_sigma_ref[b]

    x = x_ref[0]                                                        # (C, T)

    # --- model(x, t): per-pixel MLP, computed transposed so pixels stay on lanes
    h = jnp.dot(w1t_ref[...], x, preferred_element_type=jnp.float32)    # (Hd, T)
    h = h + b1t_ref[...] + t * twt_ref[...]                             # lane bcast
    h = jnp.tanh(h)                                                     # EUP
    score = jnp.dot(w2t_ref[...], h, preferred_element_type=jnp.float32)  # (C, T)
    score = score + b2t_ref[...]

    # --- rescale: score / sigma_t(t); inv_sigma precomputed in the wrapper ---
    o_ref[0] = score * inv_sigma


def _pick_hw_tile(hw, max_tile=2048):
    """Largest multiple-of-128 divisor of hw not exceeding max_tile (or hw)."""
    if hw <= max_tile:
        return hw
    for cand in range(max_tile, 127, -128):
        if hw % cand == 0:
            return cand
    return hw


def sde_forward(x_nchw, t, params, *, rescale=True):
    """SDEBase(rescale=True).forward with an in-kernel synthetic score model.

    x_nchw: (B, C, H, W) float32   t: (B,) float32
    returns (B, C, H, W) float32
    """
    assert rescale, "kernel is compiled for the rescale=True path"
    w1, b1, tw, w2, b2 = params
    B, C, H, W = x_nchw.shape
    HW = H * W
    Hd = w1.shape[1]

    # Pre-transpose the (tiny) weights so the kernel keeps pixels on lanes.
    w1t = jnp.asarray(w1, jnp.float32).T              # (Hd, C)
    b1t = jnp.asarray(b1, jnp.float32).reshape(Hd, 1)
    twt = jnp.asarray(tw, jnp.float32).reshape(Hd, 1)
    w2t = jnp.asarray(w2, jnp.float32).T              # (C, Hd)
    b2t = jnp.asarray(b2, jnp.float32).reshape(C, 1)

    # NCHW -> (B, C, HW): pure reshape (contiguous), no XLA transpose.
    x = x_nchw.reshape(B, C, HW).astype(jnp.float32)

    t32 = t.astype(jnp.float32)
    # inv_sigma = 1 / (SIGMA_MIN * (SIGMA_MAX/SIGMA_MIN)**t), computed once on (B,).
    inv_sigma = jnp.float32(1.0 / SIGMA_MIN) * jnp.exp(
        -t32 * jnp.float32(_LOG_SIGMA_RATIO))

    T = _pick_hw_tile(HW)
    n_tiles = HW // T

    # Explicit VMEM budget (portable to v7x's 64 MiB VMEM): double-buffered
    # in/out tiles + resident weights + intermediates, with generous headroom.
    tile_bytes = C * T * 4
    weight_bytes = (Hd * C + 2 * Hd + C * Hd + C) * 4
    vmem_need = 4 * tile_bytes + weight_bytes + 2 * Hd * T * 4
    vmem_limit = int(min(max(4 * vmem_need, 8 << 20), 32 << 20))

    out = pl.pallas_call(
        _sde_forward_kernel,
        out_shape=jax.ShapeDtypeStruct((B, C, HW), jnp.float32),
        grid_spec=pltpu.PrefetchScalarGridSpec(
            num_scalar_prefetch=2,                       # t, inv_sigma -> SMEM
            grid=(B, n_tiles),
            in_specs=[
                pl.BlockSpec((1, C, T), lambda b, j, *_: (b, 0, j)),   # x
                pl.BlockSpec((Hd, C), lambda b, j, *_: (0, 0)),        # w1t
                pl.BlockSpec((Hd, 1), lambda b, j, *_: (0, 0)),        # b1t
                pl.BlockSpec((Hd, 1), lambda b, j, *_: (0, 0)),        # twt
                pl.BlockSpec((C, Hd), lambda b, j, *_: (0, 0)),        # w2t
                pl.BlockSpec((C, 1), lambda b, j, *_: (0, 0)),         # b2t
            ],
            out_specs=pl.BlockSpec((1, C, T), lambda b, j, *_: (b, 0, j)),
        ),
        compiler_params=pltpu.CompilerParams(
            dimension_semantics=("parallel", "parallel"),
            vmem_limit_bytes=vmem_limit),
    )(t32, inv_sigma, x, w1t, b1t, twt, w2t, b2t)

    # (B, C, HW) -> NCHW: reshape only, no transpose.
    return out.reshape(B, C, H, W)


def ref_forward(x_nchw, t, params):
    """Pure-JAX reference of the same forward pass (for correctness check)."""
    w1, b1, tw, w2, b2 = params
    B, C, H, W = x_nchw.shape
    x = jnp.transpose(x_nchw, (0, 2, 3, 1)).reshape(B, H * W, C)
    h = jnp.tanh(x @ w1 + b1[None] + t[:, None, None] * tw[None])
    score = h @ w2 + b2[None]
    sigma = SIGMA_MIN * (SIGMA_MAX / SIGMA_MIN) ** t
    score = score / sigma[:, None, None]
    return jnp.transpose(score.reshape(B, H, W, C), (0, 3, 1, 2))


def make_params(key, c, hidden):
    k1, k2, k3, k4, k5 = jax.random.split(key, 5)
    w1 = jax.random.normal(k1, (c, hidden), jnp.float32) * 0.2
    b1 = jax.random.normal(k2, (1, hidden), jnp.float32) * 0.1
    tw = jax.random.normal(k3, (1, hidden), jnp.float32) * 0.1
    w2 = jax.random.normal(k4, (hidden, c), jnp.float32) * 0.2
    b2 = jax.random.normal(k5, (1, c), jnp.float32) * 0.1
    return (w1, b1, tw, w2, b2)


if __name__ == "__main__":
    B, C, H, W = 2, 4, 16, 16
    HIDDEN = 32

    key = jax.random.PRNGKey(0)
    kx, kt, kp = jax.random.split(key, 3)

    x = jax.random.normal(kx, (B, C, H, W), jnp.float32)
    # sample_time_batch: uniform in (eps, 1]
    t = (EPS - 1.0) * jax.random.uniform(kt, (B,), jnp.float32) + 1.0
    params = make_params(kp, C, HIDDEN)

    fwd = jax.jit(functools.partial(sde_forward, rescale=True))
    out = fwd(x, t, params)
    out = jax.block_until_ready(out)

    ref = jax.block_until_ready(ref_forward(x, t, params))
    assert out.shape == (B, C, H, W)
    assert jnp.allclose(out, ref, rtol=1e-3, atol=1e-3), (
        float(jnp.max(jnp.abs(out - ref))))

    print("KERNEL_OK")
</pallas_src>

<mosaic_0001>
module attributes {stable_mosaic.version = 11 : i64} {
  func.func @_sde_forward_kernel(%arg0: i32, %arg1: i32, %arg2: memref<2xf32, #tpu.memory_space<smem>>, %arg3: memref<2xf32, #tpu.memory_space<smem>>, %arg4: memref<1x4x256xf32, #tpu.memory_space<vmem>>, %arg5: memref<32x4xf32, #tpu.memory_space<vmem>>, %arg6: memref<32x1xf32, #tpu.memory_space<vmem>>, %arg7: memref<32x1xf32, #tpu.memory_space<vmem>>, %arg8: memref<4x32xf32, #tpu.memory_space<vmem>>, %arg9: memref<4x1xf32, #tpu.memory_space<vmem>>, %arg10: memref<1x4x256xf32, #tpu.memory_space<vmem>>) attributes {dimension_semantics = [#tpu.dimension_semantics<parallel>, #tpu.dimension_semantics<parallel>], iteration_bounds = array<i64: 2, 1>, scalar_prefetch = 2 : i64, scratch_operands = 0 : i64, tpu.core_type = #tpu.core_type<tc>, window_params = [{transform_indices = @transform_0, window_bounds = array<i64: 1, 4, 256>}, {pipeline_mode = #tpu.pipeline_mode<synchronous>, transform_indices = @transform_1, window_bounds = array<i64: 32, 4>}, {pipeline_mode = #tpu.pipeline_mode<synchronous>, transform_indices = @transform_2, window_bounds = array<i64: 32, 1>}, {pipeline_mode = #tpu.pipeline_mode<synchronous>, transform_indices = @transform_3, window_bounds = array<i64: 32, 1>}, {pipeline_mode = #tpu.pipeline_mode<synchronous>, transform_indices = @transform_4, window_bounds = array<i64: 4, 32>}, {pipeline_mode = #tpu.pipeline_mode<synchronous>, transform_indices = @transform_5, window_bounds = array<i64: 4, 1>}, {transform_indices = @transform_6, window_bounds = array<i64: 1, 4, 256>}]} {
    %0 = arith.index_cast %arg0 : i32 to index
    %1 = memref.load %arg2[%0] : memref<2xf32, #tpu.memory_space<smem>>
    %2 = arith.index_cast %arg0 : i32 to index
    %3 = memref.load %arg3[%2] : memref<2xf32, #tpu.memory_space<smem>>
    %c0 = arith.constant 0 : index
    %c0_0 = arith.constant 0 : index
    %c0_1 = arith.constant 0 : index
    %4 = vector.load %arg4[%c0, %c0_0, %c0_1] : memref<1x4x256xf32, #tpu.memory_space<vmem>>, vector<1x4x256xf32>
    %5 = vector.shape_cast %4 : vector<1x4x256xf32> to vector<4x256xf32>
    %c0_2 = arith.constant 0 : index
    %c0_3 = arith.constant 0 : index
    %6 = vector.load %arg5[%c0_2, %c0_3] : memref<32x4xf32, #tpu.memory_space<vmem>>, vector<32x4xf32>
    %cst = arith.constant dense<0.000000e+00> : vector<32x256xf32>
    %7 = tpu.matmul %6, %5, %cst {dimension_numbers = #tpu.dot_dimension_numbers<[1], [0], [0], [1], [0, 0, 1, 1], [], []>} : vector<32x4xf32>, vector<4x256xf32>, vector<32x256xf32> -> vector<32x256xf32>
    %c0_4 = arith.constant 0 : index
    %c0_5 = arith.constant 0 : index
    %8 = vector.load %arg6[%c0_4, %c0_5] : memref<32x1xf32, #tpu.memory_space<vmem>>, vector<32x1xf32>
    %9 = vector.broadcast %8 : vector<32x1xf32> to vector<32x256xf32>
    %10 = arith.addf %7, %9 : vector<32x256xf32>
    %c0_6 = arith.constant 0 : index
    %c0_7 = arith.constant 0 : index
    %11 = vector.load %arg7[%c0_6, %c0_7] : memref<32x1xf32, #tpu.memory_space<vmem>>, vector<32x1xf32>
    %12 = vector.broadcast %1 : f32 to vector<32x1xf32>
    %13 = arith.mulf %12, %11 : vector<32x1xf32>
    %14 = vector.broadcast %13 : vector<32x1xf32> to vector<32x256xf32>
    %15 = arith.addf %10, %14 : vector<32x256xf32>
    %16 = math.tanh %15 : vector<32x256xf32>
    %c0_8 = arith.constant 0 : index
    %c0_9 = arith.constant 0 : index
    %17 = vector.load %arg8[%c0_8, %c0_9] : memref<4x32xf32, #tpu.memory_space<vmem>>, vector<4x32xf32>
    %cst_10 = arith.constant dense<0.000000e+00> : vector<4x256xf32>
    %18 = tpu.matmul %17, %16, %cst_10 {dimension_numbers = #tpu.dot_dimension_numbers<[1], [0], [0], [1], [0, 0, 1, 1], [], []>} : vector<4x32xf32>, vector<32x256xf32>, vector<4x256xf32> -> vector<4x256xf32>
    %c0_11 = arith.constant 0 : index
    %c0_12 = arith.constant 0 : index
    %19 = vector.load %arg9[%c0_11, %c0_12] : memref<4x1xf32, #tpu.memory_space<vmem>>, vector<4x1xf32>
    %20 = vector.broadcast %19 : vector<4x1xf32> to vector<4x256xf32>
    %21 = arith.addf %18, %20 : vector<4x256xf32>
    %22 = vector.broadcast %3 : f32 to vector<4x256xf32>
    %23 = arith.mulf %21, %22 : vector<4x256xf32>
    %c0_13 = arith.constant 0 : index
    %c0_14 = arith.constant 0 : index
    %c0_15 = arith.constant 0 : index
    %24 = vector.load %arg10[%c0_13, %c0_14, %c0_15] : memref<1x4x256xf32, #tpu.memory_space<vmem>>, vector<1x4x256xf32>
    %25 = vector.shape_cast %24 : vector<1x4x256xf32> to vector<4x256xf32>
    %26 = vector.shape_cast %23 : vector<4x256xf32> to vector<1x4x256xf32>
    tpu.vector_store %arg10[%c0_13, %c0_14, %c0_15], %26 {strides = array<i32>} : memref<1x4x256xf32, #tpu.memory_space<vmem>>, vector<1x4x256xf32>,
    return
  }
  func.func @transform_0(%arg0: i32, %arg1: i32, %arg2: memref<2xf32, #tpu.memory_space<smem>>, %arg3: memref<2xf32, #tpu.memory_space<smem>>) -> (i32, i32, i32) {
    %c0_i32 = arith.constant 0 : i32
    %c0_i32_0 = arith.constant 0 : i32
    return %arg0, %c0_i32, %arg1 : i32, i32, i32
  }
  func.func @transform_1(%arg0: i32, %arg1: i32, %arg2: memref<2xf32, #tpu.memory_space<smem>>, %arg3: memref<2xf32, #tpu.memory_space<smem>>) -> (i32, i32) {
    %c0_i32 = arith.constant 0 : i32
    %c0_i32_0 = arith.constant 0 : i32
    %c0_i32_1 = arith.constant 0 : i32
    return %c0_i32, %c0_i32_0 : i32, i32
  }
  func.func @transform_2(%arg0: i32, %arg1: i32, %arg2: memref<2xf32, #tpu.memory_space<smem>>, %arg3: memref<2xf32, #tpu.memory_space<smem>>) -> (i32, i32) {
    %c0_i32 = arith.constant 0 : i32
    %c0_i32_0 = arith.constant 0 : i32
    %c0_i32_1 = arith.constant 0 : i32
    return %c0_i32, %c0_i32_0 : i32, i32
  }
  func.func @transform_3(%arg0: i32, %arg1: i32, %arg2: memref<2xf32, #tpu.memory_space<smem>>, %arg3: memref<2xf32, #tpu.memory_space<smem>>) -> (i32, i32) {
    %c0_i32 = arith.constant 0 : i32
    %c0_i32_0 = arith.constant 0 : i32
    %c0_i32_1 = arith.constant 0 : i32
    return %c0_i32, %c0_i32_0 : i32, i32
  }
  func.func @transform_4(%arg0: i32, %arg1: i32, %arg2: memref<2xf32, #tpu.memory_space<smem>>, %arg3: memref<2xf32, #tpu.memory_space<smem>>) -> (i32, i32) {
    %c0_i32 = arith.constant 0 : i32
    %c0_i32_0 = arith.constant 0 : i32
    %c0_i32_1 = arith.constant 0 : i32
    return %c0_i32, %c0_i32_0 : i32, i32
  }
  func.func @transform_5(%arg0: i32, %arg1: i32, %arg2: memref<2xf32, #tpu.memory_space<smem>>, %arg3: memref<2xf32, #tpu.memory_space<smem>>) -> (i32, i32) {
    %c0_i32 = arith.constant 0 : i32
    %c0_i32_0 = arith.constant 0 : i32
    %c0_i32_1 = arith.constant 0 : i32
    return %c0_i32, %c0_i32_0 : i32, i32
  }
  func.func @transform_6(%arg0: i32, %arg1: i32, %arg2: memref<2xf32, #tpu.memory_space<smem>>, %arg3: memref<2xf32, #tpu.memory_space<smem>>) -> (i32, i32, i32) {
    %c0_i32 = arith.constant 0 : i32
    %c0_i32_0 = arith.constant 0 : i32
    return %arg0, %c0_i32, %arg1 : i32, i32, i32
  }
}

</mosaic_0001>

<llo_original>
// kernel: sde_forward.1
$region0: #{sde_forward.1}
  #allocation0 [shape = 'u32[]', space=smem, size = 0x4, offset = 0x4, fixed_abs, tag = 'smem constant byte address 0x4 - core index']
  #allocation1 [shape = 'u32[72,128]{1,0:T(1,128)}', space=vmem, size = 0x9000, scoped, tag = 'internal scratch']
  #allocation2 [shape = 's32[1]{0}', space=sflag, size = 0x4, scoped, tag = 'scoped memory for sde_forward.1']
  #allocation3 [shape = 'u8[512]{0}', space=smem, size = 0x200, scoped, tag = 'prefetched SMEM operand 0']
  #allocation4 [shape = 'u8[512]{0}', space=smem, size = 0x200, scoped, tag = 'prefetched SMEM operand 1']
  %s0 = inlined_call_operand.vmem [shape: f32[2], index: 0, kind: input, shape index: {}]
  %s1 = inlined_call_operand.vmem [shape: f32[2], index: 1, kind: input, shape index: {}]
  %s2 = inlined_call_operand.vmem [shape: f32[2,4,256], index: 2, kind: input, shape index: {}]
  %s3 = inlined_call_operand.vmem [shape: f32[32,4], index: 3, kind: input, shape index: {}]
  %s4 = inlined_call_operand.vmem [shape: f32[32,1], index: 4, kind: input, shape index: {}]
  %s5 = inlined_call_operand.vmem [shape: f32[32,1], index: 5, kind: input, shape index: {}]
  %s6 = inlined_call_operand.vmem [shape: f32[4,32], index: 6, kind: input, shape index: {}]
  %s7 = inlined_call_operand.vmem [shape: f32[4,1], index: 7, kind: input, shape index: {}]
  %s8 = inlined_call_operand.vmem [shape: f32[2,4,256], index: 8, kind: output, shape index: {}]
  %s9 = sld [smem:[#allocation0]]
  $region57: #{sde_forward.1} parent=0
    _
  %s11 = ssub.s32 1, %s9
  %s12 = scalar_select 0, %s11, %s9
  %s14 = sshll.u32 %s0, 4
  %s15 = int_to_ptr.vmem [resolvable:$true] %s14
  %17 = dma.vmem_to_smem %s15, 16, [#allocation3], [#allocation2]
  %s19 = sshll.u32 %s1, 4
  %s20 = int_to_ptr.vmem [resolvable:$true] %s19
  %22 = dma.vmem_to_smem %s20, 16, [#allocation4], [#allocation2]
  %24 = dma.done [#allocation2], 32
  %25 = sfence
  loop: start=0, step=1, limit=4
  $region2: #{sde_forward.1} parent=0 // loop_pre_header
    _
  $region3: #{sde_forward.1} parent=0 // loop_header
    %s27 = sphi 0, %s31
    %p28 = scmp.ge.s32.totalorder %s27, 4
    %s34 = sphi 0, %s46
    %s35 = sphi 0, %s42
    %s36 = sphi 0, %s34
    %s37 = sphi 0, %s35
    %s38 = sphi 0, %s36
    %s39 = sphi 0, %s37
    %s51 = sphi 0, %s53
    %s54 = sphi 0, %s51
    %s55 = sphi 0, %s54
    %s71 = sphi 0, %s55
    %s75 = sphi 0, %s75
    %s77 = sphi 0, %s75
    %s78 = sphi 0, %s77
    %s92 = sphi 0, %s78
    %s96 = sphi 0, %s96
    %s98 = sphi 0, %s96
    %s99 = sphi 0, %s98
    %s113 = sphi 0, %s99
    %s117 = sphi 0, %s117
    %s119 = sphi 0, %s117
    %s120 = sphi 0, %s119
    %s134 = sphi 0, %s120
    %s138 = sphi 0, %s138
    %s140 = sphi 0, %s138
    %s141 = sphi 0, %s140
    %s155 = sphi 0, %s141
    %s159 = sphi 0, %s159
    %s161 = sphi 0, %s159
    %s162 = sphi 0, %s161
    %s176 = sphi 0, %s162
    %s184 = sphi 0, %s186
    %s187 = sphi 0, %s184
    %s188 = sphi 0, %s187
    %s204 = sphi 0, %s188
  $region4: #{sde_forward.1} parent=0 // loop_header_branch
    %30 = sbr.rel (%p28) target = $region8
  $region5: #{sde_forward.1} parent=0 // loop_body
    %s32 = ssub.s32 %s27, 1
    %s33 = ssub.s32 %s27, 2
    %s40 = sadd.s32 1, %s35
    %p41 = scmp.ge.s32.totalorder %s40, 1
    %s42 = scalar_select %p41, 0, %s40
    %s43 = sadd.s32 1, %s34
    %s44 = scalar_select %p41, %s43, %s34
    %p45 = scmp.ge.s32.totalorder %s44, 2
    %s46 = scalar_select %p45, 0, %s44
    %s47 = ssub.s32 %s34, %s46
    %s48 = ssub.s32 %s35, %s42
    %s49 = sor.u32 %s47, %s48
    %p50 = scmp.eq.s32.totalorder %s49, 0
    %s52 = sadd.s32 %s51, 1
    %s53 = scalar_select %p50, %s51, %s52
    %p56 = pneg %p50
    %p57 = scmp.eq.s32.totalorder %s27, 1
    %p58 = por %p56, %p57
    %p59 = scmp.ne.s32.totalorder %s51, %s54
    %p60 = scmp.eq.s32.totalorder %s27, 0
    %p61 = por %p59, %p60
    %p62 = scmp.ne.s32.totalorder %s51, %s54
    %p63 = scmp.eq.s32.totalorder %s32, 1
    %p64 = por %p62, %p63
    %p65 = scmp.ne.s32.totalorder %s54, %s55
    %p66 = scmp.eq.s32.totalorder %s32, 0
    %p67 = por %p65, %p66
    %p68 = scmp.ne.s32.totalorder %s54, %s55
    %p69 = scmp.eq.s32.totalorder %s33, 1
    %p70 = por %p68, %p69
    %p72 = scmp.ne.s32.totalorder %s55, %s71
    %p73 = scmp.eq.s32.totalorder %s33, 0
    %p74 = por %p72, %p73
    %s76 = sadd.s32 %s75, 1
    %p79 = scmp.eq.s32.totalorder %s27, 1
    %p80 = scmp.ne.s32.totalorder %s75, %s77
    %p81 = scmp.eq.s32.totalorder %s27, 0
    %p82 = por %p80, %p81
    %p83 = scmp.ne.s32.totalorder %s75, %s77
    %p84 = scmp.eq.s32.totalorder %s32, 1
    %p85 = por %p83, %p84
    %p86 = scmp.ne.s32.totalorder %s77, %s78
    %p87 = scmp.eq.s32.totalorder %s32, 0
    %p88 = por %p86, %p87
    %p89 = scmp.ne.s32.totalorder %s77, %s78
    %p90 = scmp.eq.s32.totalorder %s33, 1
    %p91 = por %p89, %p90
    %p93 = scmp.ne.s32.totalorder %s78, %s92
    %p94 = scmp.eq.s32.totalorder %s33, 0
    %p95 = por %p93, %p94
    %s97 = sadd.s32 %s96, 1
    %p100 = scmp.eq.s32.totalorder %s27, 1
    %p101 = scmp.ne.s32.totalorder %s96, %s98
    %p102 = scmp.eq.s32.totalorder %s27, 0
    %p103 = por %p101, %p102
    %p104 = scmp.ne.s32.totalorder %s96, %s98
    %p105 = scmp.eq.s32.totalorder %s32, 1
    %p106 = por %p104, %p105
    %p107 = scmp.ne.s32.totalorder %s98, %s99
    %p108 = scmp.eq.s32.totalorder %s32, 0
    %p109 = por %p107, %p108
    %p110 = scmp.ne.s32.totalorder %s98, %s99
    %p111 = scmp.eq.s32.totalorder %s33, 1
    %p112 = por %p110, %p111
    %p114 = scmp.ne.s32.totalorder %s99, %s113
    %p115 = scmp.eq.s32.totalorder %s33, 0
    %p116 = por %p114, %p115
    %s118 = sadd.s32 %s117, 1
    %p121 = scmp.eq.s32.totalorder %s27, 1
    %p122 = scmp.ne.s32.totalorder %s117, %s119
    %p123 = scmp.eq.s32.totalorder %s27, 0
    %p124 = por %p122, %p123
    %p125 = scmp.ne.s32.totalorder %s117, %s119
    %p126 = scmp.eq.s32.totalorder %s32, 1
    %p127 = por %p125, %p126
    %p128 = scmp.ne.s32.totalorder %s119, %s120
    %p129 = scmp.eq.s32.totalorder %s32, 0
    %p130 = por %p128, %p129
    %p131 = scmp.ne.s32.totalorder %s119, %s120
    %p132 = scmp.eq.s32.totalorder %s33, 1
    %p133 = por %p131, %p132
    %p135 = scmp.ne.s32.totalorder %s120, %s134
    %p136 = scmp.eq.s32.totalorder %s33, 0
    %p137 = por %p135, %p136
    %s139 = sadd.s32 %s138, 1
    %p142 = scmp.eq.s32.totalorder %s27, 1
    %p143 = scmp.ne.s32.totalorder %s138, %s140
    %p144 = scmp.eq.s32.totalorder %s27, 0
    %p145 = por %p143, %p144
    %p146 = scmp.ne.s32.totalorder %s138, %s140
    %p147 = scmp.eq.s32.totalorder %s32, 1
    %p148 = por %p146, %p147
    %p149 = scmp.ne.s32.totalorder %s140, %s141
    %p150 = scmp.eq.s32.totalorder %s32, 0
    %p151 = por %p149, %p150
    %p152 = scmp.ne.s32.totalorder %s140, %s141
    %p153 = scmp.eq.s32.totalorder %s33, 1
    %p154 = por %p152, %p153
    %p156 = scmp.ne.s32.totalorder %s141, %s155
    %p157 = scmp.eq.s32.totalorder %s33, 0
    %p158 = por %p156, %p157
    %s160 = sadd.s32 %s159, 1
    %p163 = scmp.eq.s32.totalorder %s27, 1
    %p164 = scmp.ne.s32.totalorder %s159, %s161
    %p165 = scmp.eq.s32.totalorder %s27, 0
    %p166 = por %p164, %p165
    %p167 = scmp.ne.s32.totalorder %s159, %s161
    %p168 = scmp.eq.s32.totalorder %s32, 1
    %p169 = por %p167, %p168
    %p170 = scmp.ne.s32.totalorder %s161, %s162
    %p171 = scmp.eq.s32.totalorder %s32, 0
    %p172 = por %p170, %p171
    %p173 = scmp.ne.s32.totalorder %s161, %s162
    %p174 = scmp.eq.s32.totalorder %s33, 1
    %p175 = por %p173, %p174
    %p177 = scmp.ne.s32.totalorder %s162, %s176
    %p178 = scmp.eq.s32.totalorder %s33, 0
    %p179 = por %p177, %p178
    %s180 = ssub.s32 %s34, %s46
    %s181 = ssub.s32 %s35, %s42
    %s182 = sor.u32 %s180, %s181
    %p183 = scmp.eq.s32.totalorder %s182, 0
    %s185 = sadd.s32 %s184, 1
    %s186 = scalar_select %p183, %s184, %s185
    %p189 = pneg %p183
    %p190 = scmp.eq.s32.totalorder %s27, 1
    %p191 = por %p189, %p190
    %p192 = scmp.ne.s32.totalorder %s184, %s187
    %p193 = scmp.eq.s32.totalorder %s27, 0
    %p194 = por %p192, %p193
    %p195 = scmp.ne.s32.totalorder %s184, %s187
    %p196 = scmp.eq.s32.totalorder %s32, 1
    %p197 = por %p195, %p196
    %p198 = scmp.ne.s32.totalorder %s187, %s188
    %p199 = scmp.eq.s32.totalorder %s32, 0
    %p200 = por %p198, %p199
    %p201 = scmp.ne.s32.totalorder %s187, %s188
    %p202 = scmp.eq.s32.totalorder %s33, 1
    %p203 = por %p201, %p202
    %p205 = scmp.ne.s32.totalorder %s188, %s204
    %p206 = scmp.eq.s32.totalorder %s33, 0
    %p207 = por %p205, %p206
    %p208 = scmp.le.s32.totalorder 1, %s27
    %p209 = scmp.lt.s32.totalorder %s27, 3
    %p210 = pnand %p208, %p209
    %p211 = pneg %p210
    // Predicated region
    $region9: #{sde_forward.1} parent=5 // pred_check
      _
    $region10: #{sde_forward.1} parent=5 // pred_check_branch
      %213 = sbr.rel (%p210) target = $region12
    $region11: #{sde_forward.1} parent=5 // pred_region
      %s214 = ssub.s32 %s27, 1
      // Predicated region
      $region13: #{sde_forward.1} parent=11 // pred_check
        %p215 = pneg %p88
      $region14: #{sde_forward.1} parent=11 // pred_check_branch
        %217 = sbr.rel (%p215) target = $region16
      $region15: #{sde_forward.1} parent=11 // pred_region
        _
      $region16: #{sde_forward.1} parent=11 // pred_fallthru
        _
      // Predicated region
      $region17: #{sde_forward.1} parent=11 // pred_check
        %p218 = pneg %p109
      $region18: #{sde_forward.1} parent=11 // pred_check_branch
        %220 = sbr.rel (%p218) target = $region20
      $region19: #{sde_forward.1} parent=11 // pred_region
        _
      $region20: #{sde_forward.1} parent=11 // pred_fallthru
        _
      // Predicated region
      $region21: #{sde_forward.1} parent=11 // pred_check
        %p221 = pneg %p130
      $region22: #{sde_forward.1} parent=11 // pred_check_branch
        %223 = sbr.rel (%p221) target = $region24
      $region23: #{sde_forward.1} parent=11 // pred_region
        _
      $region24: #{sde_forward.1} parent=11 // pred_fallthru
        _
      // Predicated region
      $region25: #{sde_forward.1} parent=11 // pred_check
        %p224 = pneg %p151
      $region26: #{sde_forward.1} parent=11 // pred_check_branch
        %226 = sbr.rel (%p224) target = $region28
      $region27: #{sde_forward.1} parent=11 // pred_region
        _
      $region28: #{sde_forward.1} parent=11 // pred_fallthru
        _
      // Predicated region
      $region29: #{sde_forward.1} parent=11 // pred_check
        %p227 = pneg %p172
      $region30: #{sde_forward.1} parent=11 // pred_check_branch
        %229 = sbr.rel (%p227) target = $region32
      $region31: #{sde_forward.1} parent=11 // pred_region
        _
      $region32: #{sde_forward.1} parent=11 // pred_fallthru
        _
    $region12: #{sde_forward.1} parent=5 // pred_fallthru
      _
    %p230 = scmp.lt.s32.totalorder %s27, 2
    // Predicated region
    $region33: #{sde_forward.1} parent=5 // pred_check
      %p231 = pneg %p230
    $region34: #{sde_forward.1} parent=5 // pred_check_branch
      %233 = sbr.rel (%p231) target = $region36
    $region35: #{sde_forward.1} parent=5 // pred_region
      // Predicated region
      $region37: #{sde_forward.1} parent=35 // pred_check
        %p234 = pneg %p61
      $region38: #{sde_forward.1} parent=35 // pred_check_branch
        %236 = sbr.rel (%p234) target = $region40
      $region39: #{sde_forward.1} parent=35 // pred_region
        %s237 = smul.u32 2, %s35
        %p238 = scmp.lt.s32.totalorder %s34, 1
        %s239 = scalar_select %p238, %s34, 1
        %p240 = scmp.lt.s32.totalorder %s237, 1
        %s241 = scalar_select %p240, %s237, 1
        %s242 = smul.addr %s239, 2
        %s243 = sadd.s32 %s241, %s242
        %s244 = smul.addr %s243, 4
        %s245 = scalar_lea.vmem %s2, %s244
        %s246 = smul.u32 2, %s35
      $region40: #{sde_forward.1} parent=35 // pred_fallthru
        _
    $region36: #{sde_forward.1} parent=5 // pred_fallthru
      _
    %p247 = scmp.le.s32.totalorder 1, %s27
    %p248 = scmp.lt.s32.totalorder %s27, 3
    %p249 = pnand %p247, %p248
    %p250 = pneg %p249
    // Predicated region
    $region41: #{sde_forward.1} parent=5 // pred_check
      _
    $region42: #{sde_forward.1} parent=5 // pred_check_branch
      %252 = sbr.rel (%p249) target = $region44
    $region43: #{sde_forward.1} parent=5 // pred_region
      %s253 = ssub.s32 %s27, 1
      %s254 = smul.u32 2, %s37
      %p255 = scmp.lt.s32.totalorder %s36, 1
      %s256 = scalar_select %p255, %s36, 1
      %p257 = scmp.lt.s32.totalorder %s254, 1
      %s258 = scalar_select %p257, %s254, 1
      %s259 = smul.addr %s256, 2
      %s260 = sadd.s32 %s258, %s259
      %s261 = smul.addr %s260, 4
      %s262 = scalar_lea.vmem %s2, %s261
      %p263 = pneg %p67
      %p264 = pneg %p64
      %p265 = pneg %p88
      %p266 = pneg %p85
      %p267 = pneg %p109
      %p268 = pneg %p106
      %p269 = pneg %p130
      %p270 = pneg %p127
      %p271 = pneg %p151
      %p272 = pneg %p148
      %p273 = pneg %p172
      %p274 = pneg %p169
      %p275 = pneg %p200
      %p276 = pneg %p197
      %s277 = smul.u32 2, %s37
      %p278 = scmp.lt.s32.totalorder %s36, 1
      %s279 = scalar_select %p278, %s36, 1
      %p280 = scmp.lt.s32.totalorder %s277, 1
      %s281 = scalar_select %p280, %s277, 1
      %s282 = smul.addr %s279, 2
      %s283 = sadd.s32 %s281, %s282
      %s284 = smul.addr %s283, 4
      %s285 = scalar_lea.vmem %s8, %s284
      %s286 = smul.u32 2, %s37
      %p287 = scmp.lt.s32.totalorder %s36, 1
      %s288 = scalar_select %p287, %s36, 1
      %p289 = scmp.lt.s32.totalorder %s286, 1
      %s290 = scalar_select %p289, %s286, 1
      %s291 = smul.addr %s288, 2
      %s292 = sadd.s32 %s290, %s291
      %s293 = smul.addr %s292, 4
      %s294 = scalar_lea.vmem %s2, %s293
      %s295 = smul.u32 2, %s37
      %s296 = smul.u32 2, %s37
      %p297 = scmp.lt.s32.totalorder %s36, 1
      %s298 = scalar_select %p297, %s36, 1
      %p299 = scmp.lt.s32.totalorder %s296, 1
      %s300 = scalar_select %p299, %s296, 1
      %s301 = smul.addr %s298, 2
      %s302 = sadd.s32 %s300, %s301
      %s303 = smul.addr %s302, 4
      %s304 = scalar_lea.vmem %s8, %s303
      %s305 = smul.u32 2, %s37
      %s306 = sld [smem:[#allocation3 + %s36]]
      %s307 = sld [smem:[#allocation4 + %s36]]
      %v308 = vld [vmem:[%s294] sm:$0xff]
      %v309 = vld [vmem:[%s3] sm:$0xff]
      %v310 = vld [vmem:[%s3 + $0x8] sm:$0xff]
      %v311 = vld [vmem:[%s3 + $0x10] sm:$0xff]
      %v312 = vld [vmem:[%s3 + $0x18] sm:$0xff]
      %v313 = vld [vmem:[%s4] sm:$0xff]
      %v314 = vld [vmem:[%s4 + $0x8] sm:$0xff]
      %v315 = vld [vmem:[%s4 + $0x10] sm:$0xff]
      %v316 = vld [vmem:[%s4 + $0x18] sm:$0xff]
      %318 = vset.pattern.permute.xlu0 0
      %319 = vperm.xlu0 %318, %v313
      %v320 = vpop.permute.xlu0 %319
      %323 = vset.pattern.permute.xlu0 0
      %324 = vperm.xlu0 %323, %v314
      %v325 = vpop.permute.xlu0 %324
      %328 = vset.pattern.permute.xlu0 0
      %329 = vperm.xlu0 %328, %v315
      %v330 = vpop.permute.xlu0 %329
      %333 = vset.pattern.permute.xlu0 0
      %334 = vperm.xlu0 %333, %v316
      %v335 = vpop.permute.xlu0 %334
      %338 = vst [vmem:[#allocation1] ss:$2 sm:$0xff] %v308
      %v339 = vld.sshfl [vmem:[#allocation1] sm:$0xff pattern:$0x75316420]
      %v340 = vld.sshfl [vmem:[#allocation1 + $0x8] sm:$0xff pattern:$0x75316420]
      %vm341 = vcmask 31744
      %v343 = vsel %vm341, %v309, 0
      %v346 = vsel %vm341, %v310, 0
      %v349 = vsel %vm341, %v311, 0
      %v352 = vsel %vm341, %v312, 0
      %vm354 = vcmask 1043456
      %v355 = vsel %vm354, %v339, 0
      %v357 = vsel %vm354, %v340, 0
      %359 = vmatpush.msra.mxu0 0.0
      %360 = vmatpush.msra.mxu0 0.0
      %361 = vmatpush.msra.mxu0 0.0
      %362 = vmatpush.msra.mxu0 0.0
      %363 = vmatpush.msra.mxu0 0.0
      %364 = vmatpush.msra.mxu0 0.0
      %365 = vmatpush.msra.mxu0 0.0
      %366 = vmatpush.msra.mxu0 0.0
      %367 = vmatpush.msra.mxu0 0.0
      %368 = vmatpush.msra.mxu0 0.0
      %369 = vmatpush.msra.mxu0 0.0
      %370 = vmatpush.msra.mxu0 0.0
      %371 = vmatpush.msra.mxu0 0.0
      %372 = vmatpush.msra.mxu0 0.0
      %373 = vmatpush.msra.mxu0 0.0
      %374 = vmatpush.msra.mxu0 %v355
      %375 = vmatmul.f32.gmra.mxu0 %v343
      %v376 = vpop.f32.mrf.mxu0
      %v377 = vadd.f32 %v320, %v376
      %378 = vmatmul.f32.gmra.mxu0 %v346
      %v379 = vpop.f32.mrf.mxu0
      %v380 = vadd.f32 %v325, %v379
      %381 = vmatmul.f32.gmra.mxu0 %v349
      %v382 = vpop.f32.mrf.mxu0
      %v383 = vadd.f32 %v330, %v382
      %384 = vmatmul.f32.gmra.mxu0 %v352
      %v385 = vpop.f32.mrf.mxu0
      %v386 = vadd.f32 %v335, %v385
      %387 = vdwg.mxu0
      %388 = vmatpush.msra.mxu0 0.0
      %389 = vmatpush.msra.mxu0 0.0
      %390 = vmatpush.msra.mxu0 0.0
      %391 = vmatpush.msra.mxu0 0.0
      %392 = vmatpush.msra.mxu0 0.0
      %393 = vmatpush.msra.mxu0 0.0
      %394 = vmatpush.msra.mxu0 0.0
      %395 = vmatpush.msra.mxu0 0.0
      %396 = vmatpush.msra.mxu0 0.0
      %397 = vmatpush.msra.mxu0 0.0
      %398 = vmatpush.msra.mxu0 0.0
      %399 = vmatpush.msra.mxu0 0.0
      %400 = vmatpush.msra.mxu0 0.0
      %401 = vmatpush.msra.mxu0 0.0
      %402 = vmatpush.msra.mxu0 0.0
      %403 = vmatpush.msra.mxu0 %v357
      %404 = vmatmul.f32.gmra.mxu0 %v343
      %v405 = vpop.f32.mrf.mxu0
      %v406 = vadd.f32 %v320, %v405
      %407 = vmatmul.f32.gmra.mxu0 %v346
      %v408 = vpop.f32.mrf.mxu0
      %v409 = vadd.f32 %v325, %v408
      %410 = vmatmul.f32.gmra.mxu0 %v349
      %v411 = vpop.f32.mrf.mxu0
      %v412 = vadd.f32 %v330, %v411
      %413 = vmatmul.f32.gmra.mxu0 %v352
      %v414 = vpop.f32.mrf.mxu0
      %v415 = vadd.f32 %v335, %v414
      %416 = vdwg.mxu0
      %v417 = vld [vmem:[%s5] sm:$0xff]
      %v418 = vld [vmem:[%s5 + $0x8] sm:$0xff]
      %v419 = vld [vmem:[%s5 + $0x10] sm:$0xff]
      %v420 = vld [vmem:[%s5 + $0x18] sm:$0xff]
      %v421 = vstv %s306
      %v422 = vmul.f32 %v421, %v417
      %v423 = vmul.f32 %v421, %v418
      %v424 = vmul.f32 %v421, %v419
      %v425 = vmul.f32 %v421, %v420
      %427 = vset.pattern.permute.xlu0 0
      %428 = vperm.xlu0 %427, %v422
      %v429 = vpop.permute.xlu0 %428
      %432 = vset.pattern.permute.xlu0 0
      %433 = vperm.xlu0 %432, %v423
      %v434 = vpop.permute.xlu0 %433
      %437 = vset.pattern.permute.xlu0 0
      %438 = vperm.xlu0 %437, %v424
      %v439 = vpop.permute.xlu0 %438
      %442 = vset.pattern.permute.xlu0 0
      %443 = vperm.xlu0 %442, %v425
      %v444 = vpop.permute.xlu0 %443
      %v446 = vadd.f32 %v377, %v429
      %v447 = vadd.f32 %v406, %v429
      %v448 = vadd.f32 %v380, %v434
      %v449 = vadd.f32 %v409, %v434
      %v450 = vadd.f32 %v383, %v439
      %v451 = vadd.f32 %v412, %v439
      %v452 = vadd.f32 %v386, %v444
      %v453 = vadd.f32 %v415, %v444
      %v454 = vtanh.pop %v446
      %v455 = vtanh.pop %v447
      %v456 = vtanh.pop %v448
      %v457 = vtanh.pop %v449
      %v458 = vtanh.pop %v450
      %v459 = vtanh.pop %v451
      %v460 = vtanh.pop %v452
      %v461 = vtanh.pop %v453
      %v462 = vld [vmem:[%s6] sm:$0xf]
      %v463 = vld [vmem:[%s7] sm:$0xf]
      %465 = vset.pattern.permute.xlu0 0
      %466 = vperm.xlu0 %465, %v463
      %v467 = vpop.permute.xlu0 %466
      %vm469 = vcmask 261120
      %v471 = vsel %vm469, %v462, 0
      %473 = vmatpush.msra.mxu0 0.0
      %474 = vmatpush.msra.mxu0 0.0
      %475 = vmatpush.msra.mxu0 0.0
      %476 = vmatpush.msra.mxu0 0.0
      %477 = vmatpush.msra.mxu0 0.0
      %478 = vmatpush.msra.mxu0 0.0
      %479 = vmatpush.msra.mxu0 0.0
      %480 = vmatpush.msra.mxu0 0.0
      %481 = vmatpush.msra.mxu0 0.0
      %482 = vmatpush.msra.mxu0 0.0
      %483 = vmatpush.msra.mxu0 0.0
      %484 = vmatpush.msra.mxu0 0.0
      %485 = vmatpush.msra.mxu0 %v460
      %486 = vmatpush.msra.mxu0 %v458
      %487 = vmatpush.msra.mxu0 %v456
      %488 = vmatpush.msra.mxu0 %v454
      %489 = vmatmul.f32.gmra.mxu0 %v471
      %v490 = vpop.f32.mrf.mxu0
      %v491 = vadd.f32 %v467, %v490
      %492 = vdwg.mxu0
      %493 = vmatpush.msra.mxu0 0.0
      %494 = vmatpush.msra.mxu0 0.0
      %495 = vmatpush.msra.mxu0 0.0
      %496 = vmatpush.msra.mxu0 0.0
      %497 = vmatpush.msra.mxu0 0.0
      %498 = vmatpush.msra.mxu0 0.0
      %499 = vmatpush.msra.mxu0 0.0
      %500 = vmatpush.msra.mxu0 0.0
      %501 = vmatpush.msra.mxu0 0.0
      %502 = vmatpush.msra.mxu0 0.0
      %503 = vmatpush.msra.mxu0 0.0
      %504 = vmatpush.msra.mxu0 0.0
      %505 = vmatpush.msra.mxu0 %v461
      %506 = vmatpush.msra.mxu0 %v459
      %507 = vmatpush.msra.mxu0 %v457
      %508 = vmatpush.msra.mxu0 %v455
      %509 = vmatmul.f32.gmra.mxu0 %v471
      %v510 = vpop.f32.mrf.mxu0
      %v511 = vadd.f32 %v467, %v510
      %512 = vdwg.mxu0
      %v513 = vstv %s307
      %v514 = vmul.f32 %v491, %v513
      %v515 = vmul.f32 %v511, %v513
      %v518 = vrot.slane %v515, 4
      %v519 = vsel %vm354, %v514, %v518
      %521 = vst [vmem:[%s304] sm:$0xff] %v519
      %s522 = smul.u32 2, %s37
      %p523 = scmp.lt.s32.totalorder %s36, 1
      %s524 = scalar_select %p523, %s36, 1
      %p525 = scmp.lt.s32.totalorder %s522, 1
      %s526 = scalar_select %p525, %s522, 1
      %s527 = smul.addr %s524, 2
      %s528 = sadd.s32 %s526, %s527
      %s529 = smul.addr %s528, 4
      %s530 = scalar_lea.vmem %s8, %s529
      // Predicated region
      $region45: #{sde_forward.1} parent=43 // pred_check
        %p531 = pneg %p197
      $region46: #{sde_forward.1} parent=43 // pred_check_branch
        %533 = sbr.rel (%p531) target = $region48
      $region47: #{sde_forward.1} parent=43 // pred_region
        %s534 = smul.u32 2, %s37
      $region48: #{sde_forward.1} parent=43 // pred_fallthru
        _
    $region44: #{sde_forward.1} parent=5 // pred_fallthru
      _
    %p535 = scmp.le.s32.totalorder 2, %s27
    // Predicated region
    $region49: #{sde_forward.1} parent=5 // pred_check
      %p536 = pneg %p535
    $region50: #{sde_forward.1} parent=5 // pred_check_branch
      %538 = sbr.rel (%p536) target = $region52
    $region51: #{sde_forward.1} parent=5 // pred_region
      %s539 = ssub.s32 %s27, 2
      // Predicated region
      $region53: #{sde_forward.1} parent=51 // pred_check
        %p540 = pneg %p203
      $region54: #{sde_forward.1} parent=51 // pred_check_branch
        %542 = sbr.rel (%p540) target = $region56
      $region55: #{sde_forward.1} parent=51 // pred_region
        %s543 = smul.u32 2, %s39
        %p544 = scmp.lt.s32.totalorder %s38, 1
        %s545 = scalar_select %p544, %s38, 1
        %p546 = scmp.lt.s32.totalorder %s543, 1
        %s547 = scalar_select %p546, %s543, 1
        %s548 = smul.addr %s545, 2
        %s549 = sadd.s32 %s547, %s548
        %s550 = smul.addr %s549, 4
        %s551 = scalar_lea.vmem %s8, %s550
      $region56: #{sde_forward.1} parent=51 // pred_fallthru
        _
    $region52: #{sde_forward.1} parent=5 // pred_fallthru
      _
  $region6: #{sde_forward.1} parent=0 // loop_footer
    %s31 = sadd.s32 1, %s27
  $region7: #{sde_forward.1} parent=0 // loop_footer_branch
    %26 = sbr.rel target = $region3
  $region8: #{sde_forward.1} parent=0 // loop_exit
    _

</llo_original>
